<compile_context>
chip_gen: v7x
topology: tpu7x:2x2x1
jax: 0.10.0
libtpu: 0.0.40
codegen_flags: <defaults>
</compile_context>

<pallas_src>
import functools

import jax
import jax.numpy as jnp
from jax.experimental import pallas as pl
from jax.experimental.pallas import tpu as pltpu


EPS = 1e-5          # nn.InstanceNorm2d default
LEAKY_SLOPE = 0.2   # nn.LeakyReLU(0.2)


def _round_up(v, m):
    return (v + m - 1) // m * m


def _vmem_capacity_bytes():
    try:
        cap = getattr(pltpu.get_tpu_info(), "vmem_capacity_bytes", None)
        if cap:
            return int(cap)
    except Exception:
        pass
    return 64 * 1024 * 1024          # conservative (v7x per-TensorCore)


def _phase_slabs(x, ho, wo):
    """Stride-2 phase split of the padded bf16 input.

    Returns (N, 8*C_in, (Ho+1)*Wo) bf16 where row (pi, pj, dj, ci) at flat
    column a*Wo + b holds x_pad[n, ci, 2a + pi, 2b + 2dj + pj].  The 16 conv
    taps are recovered in-kernel via the two row shifts di in {0,1} (flat
    offsets {0, Wo}), so HBM holds ~2x the input elements in bf16 (~1x the f32
    input bytes) instead of a 4x-expanded im2col tensor.
    """
    n, c_in, h, w = x.shape
    xp = jnp.pad(x.astype(jnp.bfloat16), ((0, 0), (0, 0), (1, 1), (1, 1)))
    slabs = []
    for pi in (0, 1):
        for pj in (0, 1):
            for dj in (0, 1):
                s = 2 * dj + pj
                slabs.append(xp[:, :, pi::2, s:s + 2 * wo:2])    # (N, C, Ho+1, Wo)
    src = jnp.stack(slabs, axis=1)                               # (N, 8, C, Ho+1, Wo)
    return src.reshape(n, 8 * c_in, (ho + 1) * wo)


def _weight_taps(weight):
    """(C_out, C_in, 4, 4) f32 -> (2, C_out, 8*C_in) bf16, di-major, matching
    the (pi, pj, dj, ci) row order produced by _phase_slabs."""
    c_out, c_in = weight.shape[:2]
    taps = []
    for di in (0, 1):
        for pi in (0, 1):
            for pj in (0, 1):
                for dj in (0, 1):
                    taps.append(weight[:, :, 2 * di + pi, 2 * dj + pj])  # (C_out, C_in)
    w = jnp.stack(taps, axis=0).reshape(2, 8, c_out, c_in)
    w = jnp.transpose(w, (0, 2, 1, 3)).reshape(2, c_out, 8 * c_in)
    return w.astype(jnp.bfloat16)


def _make_kernel(p_tile, wo, p_valid, needs_mask):
    inv_p = 1.0 / float(p_valid)

    def kernel(src_ref, w_ref, o_ref, sum_ref, ssq_ref):
        # src_ref: (1, 8*C_in, L_pad)     bf16  phase slabs, resident per sample
        # w_ref  : (2, C_out_blk, 8*C_in) bf16  conv taps (leading dim = di)
        # o_ref  : (1, C_out_blk, P_pad)  f32   resident across the P axis
        pt = pl.program_id(2)

        @pl.when(pt == 0)
        def _():
            sum_ref[...] = jnp.zeros_like(sum_ref)
            ssq_ref[...] = jnp.zeros_like(ssq_ref)

        p0 = pl.multiple_of(pt * p_tile, p_tile)
        # One aligned window covers both row shifts (static lane offsets 0 / wo).
        win = src_ref[0, :, pl.ds(p0, p_tile + wo)]               # (K, Pt+Wo) bf16
        y = jnp.dot(w_ref[0], win[:, :p_tile],
                    preferred_element_type=jnp.float32)           # (C_out_blk, Pt)
        y = y + jnp.dot(w_ref[1], win[:, wo:wo + p_tile],
                        preferred_element_type=jnp.float32)

        if needs_mask:
            # Columns >= Ho*Wo exist only because P was padded to a lane
            # multiple; zero them so they don't perturb the statistics.
            pos = jax.lax.broadcasted_iota(jnp.int32, (1, p_tile), 1) + p0
            y = jnp.where(pos < p_valid, y, 0.0)

        # Streamed InstanceNorm statistics: single traversal of the conv output.
        sum_ref[...] += jnp.sum(y, axis=1, keepdims=True)
        ssq_ref[...] += jnp.sum(y * y, axis=1, keepdims=True)
        o_ref[0, :, pl.ds(p0, p_tile)] = y

        @pl.when(pt == pl.num_programs(2) - 1)
        def _():
            mean = sum_ref[...] * inv_p                           # (C_out_blk, 1)
            var = ssq_ref[...] * inv_p - mean * mean              # biased variance
            scale = jax.lax.rsqrt(var + EPS)                      # EUP rsqrt
            yn = (o_ref[0] - mean) * scale                        # InstanceNorm2d
            o_ref[0] = jnp.where(yn >= 0, yn, LEAKY_SLOPE * yn)   # LeakyReLU(0.2)
            # TODO(synk): dropout=0.0 in this configuration -> identity; nonzero
            # dropout would use pltpu.prng_seed / pltpu.prng_random_bits here.

    return kernel


def _pallas_conv_in_lrelu(src, w_mat, *, n, c_out, co_blk, k_src, l_pad,
                          p_pad, p_tile, wo, p_valid, needs_mask,
                          weight_pipeline, vmem_limit):
    kernel = _make_kernel(p_tile, wo, p_valid, needs_mask)
    n_co = c_out // co_blk

    w_spec_kwargs = {}
    if weight_pipeline is not None:
        w_spec_kwargs["pipeline_mode"] = weight_pipeline

    return pl.pallas_call(
        kernel,
        out_shape=jax.ShapeDtypeStruct((n, c_out, p_pad), jnp.float32),
        grid_spec=pltpu.PrefetchScalarGridSpec(
            num_scalar_prefetch=0,
            grid=(n, n_co, p_pad // p_tile),
            in_specs=[
                # Whole-sample phase slabs: resident across the co / P axes.
                pl.BlockSpec((1, k_src, l_pad), lambda i, co, pt: (i, 0, 0)),
                pl.BlockSpec((2, co_blk, k_src), lambda i, co, pt: (0, co, 0),
                             **w_spec_kwargs),
            ],
            out_specs=pl.BlockSpec((1, co_blk, p_pad),
                                   lambda i, co, pt: (i, co, 0)),
            scratch_shapes=[pltpu.VMEM((co_blk, 1), jnp.float32),   # sum
                            pltpu.VMEM((co_blk, 1), jnp.float32)],  # sum(x^2)
        ),
        compiler_params=pltpu.CompilerParams(
            dimension_semantics=("parallel", "parallel", "arbitrary"),
            vmem_limit_bytes=vmem_limit),
    )(src, w_mat)


def unet_down(x, weight):
    """x: (N, C_in, H, W) f32; weight: (C_out, C_in, 4, 4) f32 (PyTorch layout).
    Returns (N, C_out, H//2, W//2) f32."""
    n, c_in, h, w = x.shape
    c_out = weight.shape[0]
    assert h % 2 == 0 and w % 2 == 0, "UNetDown expects even spatial dims"
    ho, wo = h // 2, w // 2
    p_valid = ho * wo
    p_pad = _round_up(p_valid, 128)
    k_src = 8 * c_in
    l_pad = _round_up(p_pad + wo, 128)

    src = _phase_slabs(x, ho, wo)                          # (N, 8*C_in, (Ho+1)*Wo)
    src = jnp.pad(src, ((0, 0), (0, 0), (0, l_pad - src.shape[-1])))
    w_mat = _weight_taps(weight)                           # (2, C_out, 8*C_in)

    # C_out split: "parallel" axis for the v7x megacore; also halves the
    # resident output slab / weight block per core.  Harmless on 1-TC chips.
    co_blk = c_out // 2 if c_out % 16 == 0 else c_out
    n_co = c_out // co_blk

    # Largest P tile (multiple of 128 dividing P_pad), up to 4096 lanes.
    p_tile = 128
    for cand in (p_pad, 4096, 2048, 1024, 512, 256, 128):
        if cand <= min(p_pad, 4096) and p_pad % cand == 0:
            p_tile = cand
            break

    needs_mask = (p_pad != p_valid)
    single_buffer_weight = (n_co == 1)

    # Generation-aware VMEM limit computed from the actual buffers (+ headroom).
    bytes_src = 2 * k_src * l_pad * 2                       # double-buffered bf16
    bytes_w = (1 if single_buffer_weight else 2) * 2 * co_blk * k_src * 2
    bytes_out = 2 * co_blk * p_pad * 4                      # resident f32 slab
    bytes_tmp = (3 * co_blk * p_tile * 4                    # y / mask temporaries
                 + 2 * k_src * (p_tile + wo) * 2            # window + slices
                 + co_blk * p_pad * 4)                      # finalize temporary
    need = bytes_src + bytes_w + bytes_out + bytes_tmp + (2 << 20)
    vmem_limit = int(min(0.9 * _vmem_capacity_bytes(),
                         max(16 << 20, 1.15 * need)))

    call = functools.partial(
        _pallas_conv_in_lrelu, src, w_mat,
        n=n, c_out=c_out, co_blk=co_blk, k_src=k_src, l_pad=l_pad,
        p_pad=p_pad, p_tile=p_tile, wo=wo, p_valid=p_valid,
        needs_mask=needs_mask, vmem_limit=vmem_limit)

    if single_buffer_weight:
        try:
            # Constant index_map -> no need to double-buffer the weight block.
            out = call(weight_pipeline=pl.Buffered(1))
        except Exception:
            out = call(weight_pipeline=None)
    else:
        out = call(weight_pipeline=None)

    if needs_mask:                     # only at tiny spatial sizes
        out = out[:, :, :p_valid]
    # (N, C_out, P) -> (N, C_out, Ho, Wo): contiguous reshape, no transpose.
    return out.reshape(n, c_out, ho, wo)


if __name__ == "__main__":
    key = jax.random.PRNGKey(0)
    kx, kw = jax.random.split(key)

    # UNetDown(in_size=4, out_size=8) at a small spatial size.
    N, C_IN, H, W = 2, 4, 16, 16
    C_OUT = 8

    x = jax.random.normal(kx, (N, C_IN, H, W), dtype=jnp.float32)
    weight = 0.1 * jax.random.normal(kw, (C_OUT, C_IN, 4, 4), dtype=jnp.float32)

    y = unet_down(x, weight)
    jax.block_until_ready(y)
    assert y.shape == (N, C_OUT, H // 2, W // 2), y.shape
    assert bool(jnp.all(jnp.isfinite(y)))

    # Pure-JAX reference: Conv2d(4,2,1,bias=False) -> InstanceNorm2d -> LeakyReLU(0.2).
    ref = jax.lax.conv_general_dilated(
        x, weight, window_strides=(2, 2), padding=((1, 1), (1, 1)),
        dimension_numbers=("NCHW", "OIHW", "NCHW"))
    mean = ref.mean(axis=(2, 3), keepdims=True)
    var = ref.var(axis=(2, 3), keepdims=True)
    ref = (ref - mean) * jax.lax.rsqrt(var + EPS)
    ref = jnp.where(ref >= 0, ref, LEAKY_SLOPE * ref)
    max_err = float(jnp.max(jnp.abs(y - ref)))
    assert max_err < 1e-1, f"max abs error vs reference: {max_err}"

    print("KERNEL_OK")
</pallas_src>

<mosaic_0001>
module attributes {stable_mosaic.version = 11 : i64} {
  func.func @kernel(%arg0: i32, %arg1: i32, %arg2: i32, %arg3: memref<1x32x256xbf16, #tpu.memory_space<vmem>>, %arg4: memref<2x8x32xbf16, #tpu.memory_space<vmem>>, %arg5: memref<1x8x128xf32, #tpu.memory_space<vmem>>, %arg6: memref<8x1xf32, #tpu.memory_space<vmem>>, %arg7: memref<8x1xf32, #tpu.memory_space<vmem>>) attributes {dimension_semantics = [#tpu.dimension_semantics<parallel>, #tpu.dimension_semantics<parallel>, #tpu.dimension_semantics<arbitrary>], iteration_bounds = array<i64: 2, 1, 1>, scalar_prefetch = 0 : i64, scratch_operands = 2 : i64, tpu.core_type = #tpu.core_type<tc>, window_params = [{transform_indices = @transform_0, window_bounds = array<i64: 1, 32, 256>}, {pipeline_mode = #tpu.pipeline_mode<synchronous>, transform_indices = @transform_1, window_bounds = array<i64: 2, 8, 32>}, {transform_indices = @transform_2, window_bounds = array<i64: 1, 8, 128>}]} {
    %c0_i32 = arith.constant 0 : i32
    %0 = arith.cmpi eq, %arg2, %c0_i32 : i32
    %1 = arith.extui %0 : i1 to i32
    %c0_i32_0 = arith.constant 0 : i32
    %2 = arith.cmpi ne, %1, %c0_i32_0 : i32
    scf.if %2 {
      %cst_23 = arith.constant 0.000000e+00 : f32
      %44 = vector.broadcast %cst_23 : f32 to vector<8x1xf32>
      %c0_24 = arith.constant 0 : index
      %c0_25 = arith.constant 0 : index
      %45 = vector.load %arg6[%c0_24, %c0_25] : memref<8x1xf32, #tpu.memory_space<vmem>>, vector<8x1xf32>
      tpu.vector_store %arg6[%c0_24, %c0_25], %44 {strides = array<i32>} : memref<8x1xf32, #tpu.memory_space<vmem>>, vector<8x1xf32>,
      %cst_26 = arith.constant 0.000000e+00 : f32
      %46 = vector.broadcast %cst_26 : f32 to vector<8x1xf32>
      %c0_27 = arith.constant 0 : index
      %c0_28 = arith.constant 0 : index
      %47 = vector.load %arg7[%c0_27, %c0_28] : memref<8x1xf32, #tpu.memory_space<vmem>>, vector<8x1xf32>
      tpu.vector_store %arg7[%c0_27, %c0_28], %46 {strides = array<i32>} : memref<8x1xf32, #tpu.memory_space<vmem>>, vector<8x1xf32>,
    } else {
    }
    %c128_i32 = arith.constant 128 : i32
    %3 = arith.muli %arg2, %c128_i32 : i32
    %4 = tpu.assume_multiple %3, 128 : i32
    %c0 = arith.constant 0 : index
    %c0_1 = arith.constant 0 : index
    %5 = arith.index_cast %4 : i32 to index
    %6 = vector.load %arg3[%c0, %c0_1, %5] : memref<1x32x256xbf16, #tpu.memory_space<vmem>>, vector<1x32x136xbf16>
    %7 = vector.shape_cast %6 : vector<1x32x136xbf16> to vector<32x136xbf16>
    %c0_2 = arith.constant 0 : index
    %c0_3 = arith.constant 0 : index
    %c0_4 = arith.constant 0 : index
    %8 = vector.load %arg4[%c0_2, %c0_3, %c0_4] : memref<2x8x32xbf16, #tpu.memory_space<vmem>>, vector<1x8x32xbf16>
    %9 = vector.shape_cast %8 : vector<1x8x32xbf16> to vector<8x32xbf16>
    %10 = vector.extract_strided_slice %7 {offsets = [0, 0], sizes = [32, 128], strides = [1, 1]} : vector<32x136xbf16> to vector<32x128xbf16>
    %cst = arith.constant dense<0.000000e+00> : vector<8x128xf32>
    %11 = tpu.matmul %9, %10, %cst {dimension_numbers = #tpu.dot_dimension_numbers<[1], [0], [0], [1], [0, 0, 1, 1], [], []>} : vector<8x32xbf16>, vector<32x128xbf16>, vector<8x128xf32> -> vector<8x128xf32>
    %c1 = arith.constant 1 : index
    %c0_5 = arith.constant 0 : index
    %c0_6 = arith.constant 0 : index
    %12 = vector.load %arg4[%c1, %c0_5, %c0_6] : memref<2x8x32xbf16, #tpu.memory_space<vmem>>, vector<1x8x32xbf16>
    %13 = vector.shape_cast %12 : vector<1x8x32xbf16> to vector<8x32xbf16>
    %14 = vector.extract_strided_slice %7 {offsets = [0, 8], sizes = [32, 128], strides = [1, 1]} : vector<32x136xbf16> to vector<32x128xbf16>
    %cst_7 = arith.constant dense<0.000000e+00> : vector<8x128xf32>
    %15 = tpu.matmul %13, %14, %cst_7 {dimension_numbers = #tpu.dot_dimension_numbers<[1], [0], [0], [1], [0, 0, 1, 1], [], []>} : vector<8x32xbf16>, vector<32x128xbf16>, vector<8x128xf32> -> vector<8x128xf32>
    %16 = arith.addf %11, %15 : vector<8x128xf32>
    %17 = tpu.iota {dimensions = array<i32: 1>} : vector<1x128xi32>
    %18 = vector.broadcast %4 : i32 to vector<1x128xi32>
    %19 = arith.addi %17, %18 : vector<1x128xi32>
    %c64_i32 = arith.constant 64 : i32
    %20 = vector.broadcast %c64_i32 : i32 to vector<1x128xi32>
    %21 = arith.cmpi slt, %19, %20 : vector<1x128xi32>
    %cst_8 = arith.constant 0.000000e+00 : f32
    %22 = vector.shape_cast %21 : vector<1x128xi1> to vector<1x128xi1>
    %23 = vector.broadcast %22 : vector<1x128xi1> to vector<8x128xi1>
    %24 = vector.broadcast %cst_8 : f32 to vector<8x128xf32>
    %25 = arith.select %23, %16, %24 : vector<8x128xi1>, vector<8x128xf32>
    %c0_9 = arith.constant 0 : index
    %c0_10 = arith.constant 0 : index
    %26 = vector.load %arg6[%c0_9, %c0_10] : memref<8x1xf32, #tpu.memory_space<vmem>>, vector<8x1xf32>
    %cst_11 = arith.constant dense<0.000000e+00> : vector<8xf32>
    %27 = vector.multi_reduction <add>, %25, %cst_11 [1] : vector<8x128xf32> to vector<8xf32>
    %28 = vector.shape_cast %27 : vector<8xf32> to vector<8x1xf32>
    %29 = arith.addf %26, %28 : vector<8x1xf32>
    %c0_12 = arith.constant 0 : index
    %c0_13 = arith.constant 0 : index
    %30 = vector.load %arg6[%c0_12, %c0_13] : memref<8x1xf32, #tpu.memory_space<vmem>>, vector<8x1xf32>
    tpu.vector_store %arg6[%c0_12, %c0_13], %29 {strides = array<i32>} : memref<8x1xf32, #tpu.memory_space<vmem>>, vector<8x1xf32>,
    %c0_14 = arith.constant 0 : index
    %c0_15 = arith.constant 0 : index
    %31 = vector.load %arg7[%c0_14, %c0_15] : memref<8x1xf32, #tpu.memory_space<vmem>>, vector<8x1xf32>
    %32 = arith.mulf %25, %25 : vector<8x128xf32>
    %cst_16 = arith.constant dense<0.000000e+00> : vector<8xf32>
    %33 = vector.multi_reduction <add>, %32, %cst_16 [1] : vector<8x128xf32> to vector<8xf32>
    %34 = vector.shape_cast %33 : vector<8xf32> to vector<8x1xf32>
    %35 = arith.addf %31, %34 : vector<8x1xf32>
    %c0_17 = arith.constant 0 : index
    %c0_18 = arith.constant 0 : index
    %36 = vector.load %arg7[%c0_17, %c0_18] : memref<8x1xf32, #tpu.memory_space<vmem>>, vector<8x1xf32>
    tpu.vector_store %arg7[%c0_17, %c0_18], %35 {strides = array<i32>} : memref<8x1xf32, #tpu.memory_space<vmem>>, vector<8x1xf32>,
    %c0_19 = arith.constant 0 : index
    %c0_20 = arith.constant 0 : index
    %37 = arith.index_cast %4 : i32 to index
    %38 = vector.load %arg5[%c0_19, %c0_20, %37] : memref<1x8x128xf32, #tpu.memory_space<vmem>>, vector<1x8x128xf32>
    %39 = vector.shape_cast %38 : vector<1x8x128xf32> to vector<8x128xf32>
    %40 = vector.shape_cast %25 : vector<8x128xf32> to vector<1x8x128xf32>
    tpu.vector_store %arg5[%c0_19, %c0_20, %37], %40 {strides = array<i32>} : memref<1x8x128xf32, #tpu.memory_space<vmem>>, vector<1x8x128xf32>,
    %c0_i32_21 = arith.constant 0 : i32
    %41 = arith.cmpi eq, %arg2, %c0_i32_21 : i32
    %42 = arith.extui %41 : i1 to i32
    %c0_i32_22 = arith.constant 0 : i32
    %43 = arith.cmpi ne, %42, %c0_i32_22 : i32
    scf.if %43 {
      %c0_23 = arith.constant 0 : index
      %c0_24 = arith.constant 0 : index
      %44 = vector.load %arg6[%c0_23, %c0_24] : memref<8x1xf32, #tpu.memory_space<vmem>>, vector<8x1xf32>
      %cst_25 = arith.constant 1.562500e-02 : f32
      %45 = vector.broadcast %cst_25 : f32 to vector<8x1xf32>
      %46 = arith.mulf %44, %45 : vector<8x1xf32>
      %c0_26 = arith.constant 0 : index
      %c0_27 = arith.constant 0 : index
      %47 = vector.load %arg7[%c0_26, %c0_27] : memref<8x1xf32, #tpu.memory_space<vmem>>, vector<8x1xf32>
      %cst_28 = arith.constant 1.562500e-02 : f32
      %48 = vector.broadcast %cst_28 : f32 to vector<8x1xf32>
      %49 = arith.mulf %47, %48 : vector<8x1xf32>
      %50 = arith.mulf %46, %46 : vector<8x1xf32>
      %51 = arith.subf %49, %50 : vector<8x1xf32>
      %cst_29 = arith.constant 9.99999974E-6 : f32
      %52 = vector.broadcast %cst_29 : f32 to vector<8x1xf32>
      %53 = arith.addf %51, %52 : vector<8x1xf32>
      %54 = math.rsqrt %53 : vector<8x1xf32>
      %c0_30 = arith.constant 0 : index
      %c0_31 = arith.constant 0 : index
      %c0_32 = arith.constant 0 : index
      %55 = vector.load %arg5[%c0_30, %c0_31, %c0_32] : memref<1x8x128xf32, #tpu.memory_space<vmem>>, vector<1x8x128xf32>
      %56 = vector.shape_cast %55 : vector<1x8x128xf32> to vector<8x128xf32>
      %57 = vector.broadcast %46 : vector<8x1xf32> to vector<8x128xf32>
      %58 = arith.subf %56, %57 : vector<8x128xf32>
      %59 = vector.broadcast %54 : vector<8x1xf32> to vector<8x128xf32>
      %60 = arith.mulf %58, %59 : vector<8x128xf32>
      %cst_33 = arith.constant 0.000000e+00 : f32
      %61 = vector.broadcast %cst_33 : f32 to vector<8x128xf32>
      %62 = arith.cmpf oge, %60, %61 : vector<8x128xf32>
      %cst_34 = arith.constant 2.000000e-01 : f32
      %63 = vector.broadcast %cst_34 : f32 to vector<8x128xf32>
      %64 = arith.mulf %63, %60 : vector<8x128xf32>
      %65 = arith.select %62, %60, %64 : vector<8x128xi1>, vector<8x128xf32>
      %c0_35 = arith.constant 0 : index
      %c0_36 = arith.constant 0 : index
      %c0_37 = arith.constant 0 : index
      %66 = vector.load %arg5[%c0_35, %c0_36, %c0_37] : memref<1x8x128xf32, #tpu.memory_space<vmem>>, vector<1x8x128xf32>
      %67 = vector.shape_cast %66 : vector<1x8x128xf32> to vector<8x128xf32>
      %68 = vector.shape_cast %65 : vector<8x128xf32> to vector<1x8x128xf32>
      tpu.vector_store %arg5[%c0_35, %c0_36, %c0_37], %68 {strides = array<i32>} : memref<1x8x128xf32, #tpu.memory_space<vmem>>, vector<1x8x128xf32>,
    } else {
    }
    return
  }
  func.func @transform_0(%arg0: i32, %arg1: i32, %arg2: i32) -> (i32, i32, i32) {
    %c0_i32 = arith.constant 0 : i32
    %c0_i32_0 = arith.constant 0 : i32
    %c0_i32_1 = arith.constant 0 : i32
    return %arg0, %c0_i32, %c0_i32_0 : i32, i32, i32
  }
  func.func @transform_1(%arg0: i32, %arg1: i32, %arg2: i32) -> (i32, i32, i32) {
    %c0_i32 = arith.constant 0 : i32
    %c0_i32_0 = arith.constant 0 : i32
    %c0_i32_1 = arith.constant 0 : i32
    return %c0_i32, %arg1, %c0_i32_0 : i32, i32, i32
  }
  func.func @transform_2(%arg0: i32, %arg1: i32, %arg2: i32) -> (i32, i32, i32) {
    %c0_i32 = arith.constant 0 : i32
    %c0_i32_0 = arith.constant 0 : i32
    return %arg0, %arg1, %c0_i32 : i32, i32, i32
  }
}

module attributes {stable_mosaic.version = 11 : i64} {
  func.func @kernel(%arg0: i32, %arg1: i32, %arg2: i32, %arg3: memref<1x32x256xbf16, #tpu.memory_space<vmem>>, %arg4: memref<2x8x32xbf16, #tpu.memory_space<vmem>>, %arg5: memref<1x8x128xf32, #tpu.memory_space<vmem>>, %arg6: memref<8x1xf32, #tpu.memory_space<vmem>>, %arg7: memref<8x1xf32, #tpu.memory_space<vmem>>) attributes {dimension_semantics = [#tpu.dimension_semantics<parallel>, #tpu.dimension_semantics<parallel>, #tpu.dimension_semantics<arbitrary>], iteration_bounds = array<i64: 2, 1, 1>, scalar_prefetch = 0 : i64, scratch_operands = 2 : i64, tpu.core_type = #tpu.core_type<tc>, window_params = [{transform_indices = @transform_0, window_bounds = array<i64: 1, 32, 256>}, {transform_indices = @transform_1, window_bounds = array<i64: 2, 8, 32>}, {transform_indices = @transform_2, window_bounds = array<i64: 1, 8, 128>}]} {
    %c0_i32 = arith.constant 0 : i32
    %0 = arith.cmpi eq, %arg2, %c0_i32 : i32
    %1 = arith.extui %0 : i1 to i32
    %c0_i32_0 = arith.constant 0 : i32
    %2 = arith.cmpi ne, %1, %c0_i32_0 : i32
    scf.if %2 {
      %cst_23 = arith.constant 0.000000e+00 : f32
      %44 = vector.broadcast %cst_23 : f32 to vector<8x1xf32>
      %c0_24 = arith.constant 0 : index
      %c0_25 = arith.constant 0 : index
      %45 = vector.load %arg6[%c0_24, %c0_25] : memref<8x1xf32, #tpu.memory_space<vmem>>, vector<8x1xf32>
      tpu.vector_store %arg6[%c0_24, %c0_25], %44 {strides = array<i32>} : memref<8x1xf32, #tpu.memory_space<vmem>>, vector<8x1xf32>,
      %cst_26 = arith.constant 0.000000e+00 : f32
      %46 = vector.broadcast %cst_26 : f32 to vector<8x1xf32>
      %c0_27 = arith.constant 0 : index
      %c0_28 = arith.constant 0 : index
      %47 = vector.load %arg7[%c0_27, %c0_28] : memref<8x1xf32, #tpu.memory_space<vmem>>, vector<8x1xf32>
      tpu.vector_store %arg7[%c0_27, %c0_28], %46 {strides = array<i32>} : memref<8x1xf32, #tpu.memory_space<vmem>>, vector<8x1xf32>,
    } else {
    }
    %c128_i32 = arith.constant 128 : i32
    %3 = arith.muli %arg2, %c128_i32 : i32
    %4 = tpu.assume_multiple %3, 128 : i32
    %c0 = arith.constant 0 : index
    %c0_1 = arith.constant 0 : index
    %5 = arith.index_cast %4 : i32 to index
    %6 = vector.load %arg3[%c0, %c0_1, %5] : memref<1x32x256xbf16, #tpu.memory_space<vmem>>, vector<1x32x136xbf16>
    %7 = vector.shape_cast %6 : vector<1x32x136xbf16> to vector<32x136xbf16>
    %c0_2 = arith.constant 0 : index
    %c0_3 = arith.constant 0 : index
    %c0_4 = arith.constant 0 : index
    %8 = vector.load %arg4[%c0_2, %c0_3, %c0_4] : memref<2x8x32xbf16, #tpu.memory_space<vmem>>, vector<1x8x32xbf16>
    %9 = vector.shape_cast %8 : vector<1x8x32xbf16> to vector<8x32xbf16>
    %10 = vector.extract_strided_slice %7 {offsets = [0, 0], sizes = [32, 128], strides = [1, 1]} : vector<32x136xbf16> to vector<32x128xbf16>
    %cst = arith.constant dense<0.000000e+00> : vector<8x128xf32>
    %11 = tpu.matmul %9, %10, %cst {dimension_numbers = #tpu.dot_dimension_numbers<[1], [0], [0], [1], [0, 0, 1, 1], [], []>} : vector<8x32xbf16>, vector<32x128xbf16>, vector<8x128xf32> -> vector<8x128xf32>
    %c1 = arith.constant 1 : index
    %c0_5 = arith.constant 0 : index
    %c0_6 = arith.constant 0 : index
    %12 = vector.load %arg4[%c1, %c0_5, %c0_6] : memref<2x8x32xbf16, #tpu.memory_space<vmem>>, vector<1x8x32xbf16>
    %13 = vector.shape_cast %12 : vector<1x8x32xbf16> to vector<8x32xbf16>
    %14 = vector.extract_strided_slice %7 {offsets = [0, 8], sizes = [32, 128], strides = [1, 1]} : vector<32x136xbf16> to vector<32x128xbf16>
    %cst_7 = arith.constant dense<0.000000e+00> : vector<8x128xf32>
    %15 = tpu.matmul %13, %14, %cst_7 {dimension_numbers = #tpu.dot_dimension_numbers<[1], [0], [0], [1], [0, 0, 1, 1], [], []>} : vector<8x32xbf16>, vector<32x128xbf16>, vector<8x128xf32> -> vector<8x128xf32>
    %16 = arith.addf %11, %15 : vector<8x128xf32>
    %17 = tpu.iota {dimensions = array<i32: 1>} : vector<1x128xi32>
    %18 = vector.broadcast %4 : i32 to vector<1x128xi32>
    %19 = arith.addi %17, %18 : vector<1x128xi32>
    %c64_i32 = arith.constant 64 : i32
    %20 = vector.broadcast %c64_i32 : i32 to vector<1x128xi32>
    %21 = arith.cmpi slt, %19, %20 : vector<1x128xi32>
    %cst_8 = arith.constant 0.000000e+00 : f32
    %22 = vector.shape_cast %21 : vector<1x128xi1> to vector<1x128xi1>
    %23 = vector.broadcast %22 : vector<1x128xi1> to vector<8x128xi1>
    %24 = vector.broadcast %cst_8 : f32 to vector<8x128xf32>
    %25 = arith.select %23, %16, %24 : vector<8x128xi1>, vector<8x128xf32>
    %c0_9 = arith.constant 0 : index
    %c0_10 = arith.constant 0 : index
    %26 = vector.load %arg6[%c0_9, %c0_10] : memref<8x1xf32, #tpu.memory_space<vmem>>, vector<8x1xf32>
    %cst_11 = arith.constant dense<0.000000e+00> : vector<8xf32>
    %27 = vector.multi_reduction <add>, %25, %cst_11 [1] : vector<8x128xf32> to vector<8xf32>
    %28 = vector.shape_cast %27 : vector<8xf32> to vector<8x1xf32>
    %29 = arith.addf %26, %28 : vector<8x1xf32>
    %c0_12 = arith.constant 0 : index
    %c0_13 = arith.constant 0 : index
    %30 = vector.load %arg6[%c0_12, %c0_13] : memref<8x1xf32, #tpu.memory_space<vmem>>, vector<8x1xf32>
    tpu.vector_store %arg6[%c0_12, %c0_13], %29 {strides = array<i32>} : memref<8x1xf32, #tpu.memory_space<vmem>>, vector<8x1xf32>,
    %c0_14 = arith.constant 0 : index
    %c0_15 = arith.constant 0 : index
    %31 = vector.load %arg7[%c0_14, %c0_15] : memref<8x1xf32, #tpu.memory_space<vmem>>, vector<8x1xf32>
    %32 = arith.mulf %25, %25 : vector<8x128xf32>
    %cst_16 = arith.constant dense<0.000000e+00> : vector<8xf32>
    %33 = vector.multi_reduction <add>, %32, %cst_16 [1] : vector<8x128xf32> to vector<8xf32>
    %34 = vector.shape_cast %33 : vector<8xf32> to vector<8x1xf32>
    %35 = arith.addf %31, %34 : vector<8x1xf32>
    %c0_17 = arith.constant 0 : index
    %c0_18 = arith.constant 0 : index
    %36 = vector.load %arg7[%c0_17, %c0_18] : memref<8x1xf32, #tpu.memory_space<vmem>>, vector<8x1xf32>
    tpu.vector_store %arg7[%c0_17, %c0_18], %35 {strides = array<i32>} : memref<8x1xf32, #tpu.memory_space<vmem>>, vector<8x1xf32>,
    %c0_19 = arith.constant 0 : index
    %c0_20 = arith.constant 0 : index
    %37 = arith.index_cast %4 : i32 to index
    %38 = vector.load %arg5[%c0_19, %c0_20, %37] : memref<1x8x128xf32, #tpu.memory_space<vmem>>, vector<1x8x128xf32>
    %39 = vector.shape_cast %38 : vector<1x8x128xf32> to vector<8x128xf32>
    %40 = vector.shape_cast %25 : vector<8x128xf32> to vector<1x8x128xf32>
    tpu.vector_store %arg5[%c0_19, %c0_20, %37], %40 {strides = array<i32>} : memref<1x8x128xf32, #tpu.memory_space<vmem>>, vector<1x8x128xf32>,
    %c0_i32_21 = arith.constant 0 : i32
    %41 = arith.cmpi eq, %arg2, %c0_i32_21 : i32
    %42 = arith.extui %41 : i1 to i32
    %c0_i32_22 = arith.constant 0 : i32
    %43 = arith.cmpi ne, %42, %c0_i32_22 : i32
    scf.if %43 {
      %c0_23 = arith.constant 0 : index
      %c0_24 = arith.constant 0 : index
      %44 = vector.load %arg6[%c0_23, %c0_24] : memref<8x1xf32, #tpu.memory_space<vmem>>, vector<8x1xf32>
      %cst_25 = arith.constant 1.562500e-02 : f32
      %45 = vector.broadcast %cst_25 : f32 to vector<8x1xf32>
      %46 = arith.mulf %44, %45 : vector<8x1xf32>
      %c0_26 = arith.constant 0 : index
      %c0_27 = arith.constant 0 : index
      %47 = vector.load %arg7[%c0_26, %c0_27] : memref<8x1xf32, #tpu.memory_space<vmem>>, vector<8x1xf32>
      %cst_28 = arith.constant 1.562500e-02 : f32
      %48 = vector.broadcast %cst_28 : f32 to vector<8x1xf32>
      %49 = arith.mulf %47, %48 : vector<8x1xf32>
      %50 = arith.mulf %46, %46 : vector<8x1xf32>
      %51 = arith.subf %49, %50 : vector<8x1xf32>
      %cst_29 = arith.constant 9.99999974E-6 : f32
      %52 = vector.broadcast %cst_29 : f32 to vector<8x1xf32>
      %53 = arith.addf %51, %52 : vector<8x1xf32>
      %54 = math.rsqrt %53 : vector<8x1xf32>
      %c0_30 = arith.constant 0 : index
      %c0_31 = arith.constant 0 : index
      %c0_32 = arith.constant 0 : index
      %55 = vector.load %arg5[%c0_30, %c0_31, %c0_32] : memref<1x8x128xf32, #tpu.memory_space<vmem>>, vector<1x8x128xf32>
      %56 = vector.shape_cast %55 : vector<1x8x128xf32> to vector<8x128xf32>
      %57 = vector.broadcast %46 : vector<8x1xf32> to vector<8x128xf32>
      %58 = arith.subf %56, %57 : vector<8x128xf32>
      %59 = vector.broadcast %54 : vector<8x1xf32> to vector<8x128xf32>
      %60 = arith.mulf %58, %59 : vector<8x128xf32>
      %cst_33 = arith.constant 0.000000e+00 : f32
      %61 = vector.broadcast %cst_33 : f32 to vector<8x128xf32>
      %62 = arith.cmpf oge, %60, %61 : vector<8x128xf32>
      %cst_34 = arith.constant 2.000000e-01 : f32
      %63 = vector.broadcast %cst_34 : f32 to vector<8x128xf32>
      %64 = arith.mulf %63, %60 : vector<8x128xf32>
      %65 = arith.select %62, %60, %64 : vector<8x128xi1>, vector<8x128xf32>
      %c0_35 = arith.constant 0 : index
      %c0_36 = arith.constant 0 : index
      %c0_37 = arith.constant 0 : index
      %66 = vector.load %arg5[%c0_35, %c0_36, %c0_37] : memref<1x8x128xf32, #tpu.memory_space<vmem>>, vector<1x8x128xf32>
      %67 = vector.shape_cast %66 : vector<1x8x128xf32> to vector<8x128xf32>
      %68 = vector.shape_cast %65 : vector<8x128xf32> to vector<1x8x128xf32>
      tpu.vector_store %arg5[%c0_35, %c0_36, %c0_37], %68 {strides = array<i32>} : memref<1x8x128xf32, #tpu.memory_space<vmem>>, vector<1x8x128xf32>,
    } else {
    }
    return
  }
  func.func @transform_0(%arg0: i32, %arg1: i32, %arg2: i32) -> (i32, i32, i32) {
    %c0_i32 = arith.constant 0 : i32
    %c0_i32_0 = arith.constant 0 : i32
    %c0_i32_1 = arith.constant 0 : i32
    return %arg0, %c0_i32, %c0_i32_0 : i32, i32, i32
  }
  func.func @transform_1(%arg0: i32, %arg1: i32, %arg2: i32) -> (i32, i32, i32) {
    %c0_i32 = arith.constant 0 : i32
    %c0_i32_0 = arith.constant 0 : i32
    %c0_i32_1 = arith.constant 0 : i32
    return %c0_i32, %arg1, %c0_i32_0 : i32, i32, i32
  }
  func.func @transform_2(%arg0: i32, %arg1: i32, %arg2: i32) -> (i32, i32, i32) {
    %c0_i32 = arith.constant 0 : i32
    %c0_i32_0 = arith.constant 0 : i32
    return %arg0, %arg1, %c0_i32 : i32, i32, i32
  }
}

</mosaic_0001>

<llo_original>
// kernel: tpu_custom_call.1
$region0: #{tpu_custom_call.1}
  #allocation0 [shape = 'u32[]', space=smem, size = 0x4, offset = 0x4, fixed_abs, tag = 'smem constant byte address 0x4 - core index']
  #allocation1 [shape = 'u32[144,128]{1,0:T(1,128)}', space=vmem, size = 0x12000, scoped, tag = 'internal scratch']
  #allocation2 [shape = 'f32[8,1]{1,0:T(8,128)}', space=vmem, size = 0x1000, scoped, tag = 'scratch operand']
  #allocation3 [shape = 'f32[8,1]{1,0:T(8,128)}', space=vmem, size = 0x1000, scoped, tag = 'scratch operand']
  %s0 = inlined_call_operand.hbm [shape: bf16[2,32,256], index: 0, kind: input, shape index: {}]
  %s1 = inlined_call_operand.hbm [shape: bf16[2,8,32], index: 1, kind: input, shape index: {}]
  %s2 = inlined_call_operand.hbm [shape: f32[2,8,128], index: 2, kind: output, shape index: {}]
  %s3 = sld [smem:[#allocation0]]
  $region57: #{tpu_custom_call.1} parent=0
    _
  %s5 = ssub.s32 1, %s3
  %s6 = scalar_select 0, %s5, %s3
  $region1: #{tpu_custom_call.1} parent=0
    #allocation4 [shape = 'u8[32768]{0}', space=vmem, size = 0x8000, scoped, tag = 'input window, operand 0']
    #allocation5 [shape = 's32[2]{0}', space=sflag, size = 0x8, scoped, tag = 'scoped memory for tpu_custom_call.1']
    #allocation6 [shape = 's32[2]{0}', space=sflag, size = 0x8, scoped, tag = 'scoped memory for tpu_custom_call.1']
    #allocation7 [shape = 'u8[4096]{0}', space=vmem, size = 0x1000, scoped, tag = 'input window, operand 1, single buffered']
    #allocation8 [shape = 's32[1]{0}', space=sflag, size = 0x4, scoped, tag = 'scoped memory for tpu_custom_call.1']
    #allocation9 [shape = 'u8[8192]{0}', space=vmem, size = 0x2000, scoped, tag = 'output window, operand 0']
    %7 = vsyncpa [#allocation5], 0
    %s8 = scalar_lea.sflag [#allocation5], 1
    %9 = vsyncpa %s8, 0
    %10 = vsyncpa [#allocation8], 0
    %11 = vsyncpa [#allocation6], 0
    %s12 = scalar_lea.sflag [#allocation6], 1
    %13 = vsyncpa %s12, 0
    loop: start=0, step=1, limit=4
    $region2: #{tpu_custom_call.1} parent=1 // loop_pre_header
      _
    $region3: #{tpu_custom_call.1} parent=1 // loop_header
      %s15 = sphi 0, %s19
      %p16 = scmp.ge.s32.totalorder %s15, 4
      %s22 = sphi 0, %s41
      %s23 = sphi 0, %s37
      %s24 = sphi 0, %s33
      %s25 = sphi 0, %s22
      %s26 = sphi 0, %s23
      %s27 = sphi 0, %s24
      %s28 = sphi 0, %s25
      %s29 = sphi 0, %s26
      %s30 = sphi 0, %s27
      %s44 = sphi 0, %s46
      %s47 = sphi 0, %s44
      %s48 = sphi 0, %s47
      %s64 = sphi 0, %s48
      %s70 = sphi 0, %s72
      %s73 = sphi 0, %s70
      %s74 = sphi 0, %s73
      %s90 = sphi 0, %s74
      %s98 = sphi 0, %s100
      %s101 = sphi 0, %s98
      %s102 = sphi 0, %s101
      %s118 = sphi 0, %s102
    $region4: #{tpu_custom_call.1} parent=1 // loop_header_branch
      %18 = sbr.rel (%p16) target = $region8
    $region5: #{tpu_custom_call.1} parent=1 // loop_body
      %s20 = ssub.s32 %s15, 1
      %s21 = ssub.s32 %s15, 2
      %s31 = sadd.s32 1, %s24
      %p32 = scmp.ge.s32.totalorder %s31, 1
      %s33 = scalar_select %p32, 0, %s31
      %s34 = sadd.s32 1, %s23
      %s35 = scalar_select %p32, %s34, %s23
      %p36 = scmp.ge.s32.totalorder %s35, 1
      %s37 = scalar_select %p36, 0, %s35
      %s38 = sadd.s32 1, %s22
      %s39 = scalar_select %p36, %s38, %s22
      %p40 = scmp.ge.s32.totalorder %s39, 2
      %s41 = scalar_select %p40, 0, %s39
      %s42 = ssub.s32 %s22, %s41
      %p43 = scmp.eq.s32.totalorder %s42, 0
      %s45 = sadd.s32 %s44, 1
      %s46 = scalar_select %p43, %s44, %s45
      %p49 = pneg %p43
      %p50 = scmp.eq.s32.totalorder %s15, 1
      %p51 = por %p49, %p50
      %p52 = scmp.ne.s32.totalorder %s44, %s47
      %p53 = scmp.eq.s32.totalorder %s15, 0
      %p54 = por %p52, %p53
      %p55 = scmp.ne.s32.totalorder %s44, %s47
      %p56 = scmp.eq.s32.totalorder %s20, 1
      %p57 = por %p55, %p56
      %p58 = scmp.ne.s32.totalorder %s47, %s48
      %p59 = scmp.eq.s32.totalorder %s20, 0
      %p60 = por %p58, %p59
      %p61 = scmp.ne.s32.totalorder %s47, %s48
      %p62 = scmp.eq.s32.totalorder %s21, 1
      %p63 = por %p61, %p62
      %p65 = scmp.ne.s32.totalorder %s48, %s64
      %p66 = scmp.eq.s32.totalorder %s21, 0
      %p67 = por %p65, %p66
      %s68 = ssub.s32 %s23, %s37
      %p69 = scmp.eq.s32.totalorder %s68, 0
      %s71 = sadd.s32 %s70, 1
      %s72 = scalar_select %p69, %s70, %s71
      %p75 = pneg %p69
      %p76 = scmp.eq.s32.totalorder %s15, 1
      %p77 = por %p75, %p76
      %p78 = scmp.ne.s32.totalorder %s70, %s73
      %p79 = scmp.eq.s32.totalorder %s15, 0
      %p80 = por %p78, %p79
      %p81 = scmp.ne.s32.totalorder %s70, %s73
      %p82 = scmp.eq.s32.totalorder %s20, 1
      %p83 = por %p81, %p82
      %p84 = scmp.ne.s32.totalorder %s73, %s74
      %p85 = scmp.eq.s32.totalorder %s20, 0
      %p86 = por %p84, %p85
      %p87 = scmp.ne.s32.totalorder %s73, %s74
      %p88 = scmp.eq.s32.totalorder %s21, 1
      %p89 = por %p87, %p88
      %p91 = scmp.ne.s32.totalorder %s74, %s90
      %p92 = scmp.eq.s32.totalorder %s21, 0
      %p93 = por %p91, %p92
      %s94 = ssub.s32 %s22, %s41
      %s95 = ssub.s32 %s23, %s37
      %s96 = sor.u32 %s94, %s95
      %p97 = scmp.eq.s32.totalorder %s96, 0
      %s99 = sadd.s32 %s98, 1
      %s100 = scalar_select %p97, %s98, %s99
      %p103 = pneg %p97
      %p104 = scmp.eq.s32.totalorder %s15, 1
      %p105 = por %p103, %p104
      %p106 = scmp.ne.s32.totalorder %s98, %s101
      %p107 = scmp.eq.s32.totalorder %s15, 0
      %p108 = por %p106, %p107
      %p109 = scmp.ne.s32.totalorder %s98, %s101
      %p110 = scmp.eq.s32.totalorder %s20, 1
      %p111 = por %p109, %p110
      %p112 = scmp.ne.s32.totalorder %s101, %s102
      %p113 = scmp.eq.s32.totalorder %s20, 0
      %p114 = por %p112, %p113
      %p115 = scmp.ne.s32.totalorder %s101, %s102
      %p116 = scmp.eq.s32.totalorder %s21, 1
      %p117 = por %p115, %p116
      %p119 = scmp.ne.s32.totalorder %s102, %s118
      %p120 = scmp.eq.s32.totalorder %s21, 0
      %p121 = por %p119, %p120
      %p122 = scmp.le.s32.totalorder 1, %s15
      %p123 = scmp.lt.s32.totalorder %s15, 3
      %p124 = pnand %p122, %p123
      %p125 = pneg %p124
      // Predicated region
      $region9: #{tpu_custom_call.1} parent=5 // pred_check
        _
      $region10: #{tpu_custom_call.1} parent=5 // pred_check_branch
        %127 = sbr.rel (%p124) target = $region12
      $region11: #{tpu_custom_call.1} parent=5 // pred_region
        %s128 = ssub.s32 %s15, 1
        // Predicated region
        $region13: #{tpu_custom_call.1} parent=11 // pred_check
          %p129 = pneg %p86
        $region14: #{tpu_custom_call.1} parent=11 // pred_check_branch
          %131 = sbr.rel (%p129) target = $region16
        $region15: #{tpu_custom_call.1} parent=11 // pred_region
          %s133 = ssub.s32 128, 128
          %134 = vsyncadd [#allocation8], %s133
          %s135 = smul.addr %s26, 64
          %s136 = scalar_lea.hbm %s1, %s135
          %s137 = sshll.u32 [#allocation7], 4
          %s138 = int_to_ptr.vmem [resolvable:$true] %s137
          %143 = dma.hbm_to_vmem [thread:$0]  %s136, 128, %s138, [#allocation8], 64, 64, 4
        $region16: #{tpu_custom_call.1} parent=11 // pred_fallthru
          _
      $region12: #{tpu_custom_call.1} parent=5 // pred_fallthru
        _
      %p144 = scmp.lt.s32.totalorder %s15, 2
      // Predicated region
      $region17: #{tpu_custom_call.1} parent=5 // pred_check
        %p145 = pneg %p144
      $region18: #{tpu_custom_call.1} parent=5 // pred_check_branch
        %147 = sbr.rel (%p145) target = $region20
      $region19: #{tpu_custom_call.1} parent=5 // pred_region
        // Predicated region
        $region21: #{tpu_custom_call.1} parent=19 // pred_check
          %p148 = pneg %p54
        $region22: #{tpu_custom_call.1} parent=19 // pred_check_branch
          %150 = sbr.rel (%p148) target = $region24
        $region23: #{tpu_custom_call.1} parent=19 // pred_region
          %s151 = sand.u32 %s44, 1
          %s152 = scalar_lea.sflag [#allocation5], %s151
          %s153 = sand.u32 %s44, 1
          %s154 = smul.addr %s153, 32
          %s155 = scalar_lea.vmem [#allocation4], %s154
          %s157 = ssub.s32 512, 512
          %158 = vsyncadd %s152, %s157
          %s159 = smul.addr %s22, 8
          %s160 = smul.addr %s159, 64
          %s161 = scalar_lea.hbm %s0, %s160
          %s162 = sshll.u32 %s155, 4
          %s163 = int_to_ptr.vmem [resolvable:$true] %s162
          %168 = dma.hbm_to_vmem [thread:$0]  %s161, 512, %s163, %s152, 128, 128, 8
        $region24: #{tpu_custom_call.1} parent=19 // pred_fallthru
          _
      $region20: #{tpu_custom_call.1} parent=5 // pred_fallthru
        _
      %p169 = scmp.le.s32.totalorder 1, %s15
      %p170 = scmp.lt.s32.totalorder %s15, 3
      %p171 = pnand %p169, %p170
      %p172 = pneg %p171
      // Predicated region
      $region25: #{tpu_custom_call.1} parent=5 // pred_check
        _
      $region26: #{tpu_custom_call.1} parent=5 // pred_check_branch
        %174 = sbr.rel (%p171) target = $region28
      $region27: #{tpu_custom_call.1} parent=5 // pred_region
        %s175 = ssub.s32 %s15, 1
        %s176 = sand.u32 %s47, 1
        %s177 = scalar_lea.sflag [#allocation5], %s176
        %s178 = sand.u32 %s47, 1
        %s179 = smul.addr %s178, 32
        %s180 = scalar_lea.vmem [#allocation4], %s179
        // Predicated region
        $region29: #{tpu_custom_call.1} parent=27 // pred_check
          %p181 = pneg %p60
        $region30: #{tpu_custom_call.1} parent=27 // pred_check_branch
          %183 = sbr.rel (%p181) target = $region32
        $region31: #{tpu_custom_call.1} parent=27 // pred_region
          %184 = dma.done %s177, 512
        $region32: #{tpu_custom_call.1} parent=27 // pred_fallthru
          _
        // Predicated region
        $region33: #{tpu_custom_call.1} parent=27 // pred_check
          %p185 = pneg %p86
        $region34: #{tpu_custom_call.1} parent=27 // pred_check_branch
          %187 = sbr.rel (%p185) target = $region36
        $region35: #{tpu_custom_call.1} parent=27 // pred_region
          %188 = dma.done [#allocation8], 128
        $region36: #{tpu_custom_call.1} parent=27 // pred_fallthru
          _
        %s189 = sand.u32 %s47, 1
        %s190 = scalar_lea.sflag [#allocation5], %s189
        %s191 = sand.u32 %s47, 1
        %s192 = smul.addr %s191, 32
        %s193 = scalar_lea.vmem [#allocation4], %s192
        %p194 = pneg %p60
        %p195 = pneg %p57
        %p196 = pneg %p86
        %p197 = pneg %p83
        %p198 = pneg %p114
        %p199 = pneg %p111
        %s200 = sand.u32 %s101, 1
        %s201 = scalar_lea.sflag [#allocation6], %s200
        %s202 = sand.u32 %s101, 1
        %s203 = smul.addr %s202, 8
        %s204 = scalar_lea.vmem [#allocation9], %s203
        %p206 = scmp.eq.s32.totalorder %s27, 0
        // Predicated region
        $region37: #{tpu_custom_call.1} parent=27 // pred_check
          %p207 = pneg %p206
        $region38: #{tpu_custom_call.1} parent=27 // pred_check_branch
          %209 = sbr.rel (%p207) target = $region40
        $region39: #{tpu_custom_call.1} parent=27 // pred_region
          %vm210 = vcmask 7168
          %211 = vst.msk [vmem:[#allocation2] sm:$0xff] %vm210, 0.0
          %212 = vst.msk [vmem:[#allocation3] sm:$0xff] %vm210, 0.0
        $region40: #{tpu_custom_call.1} parent=27 // pred_fallthru
          _
        %s213 = smul.u32 %s27, 128
        %s214 = sshra.s32 %s213, 7
        %s215 = sand.u32 %s213, 127
        %s216 = smul.addr %s214, 4
        %s217 = scalar_lea.vmem %s180, %s216 [#allocation4]
        %v218 = vld [vmem:[%s217] sm:$0xff]
        %v219 = vld [vmem:[%s217 + $0x8] sm:$0xff]
        %v220 = vld [vmem:[%s217 + $0x10] sm:$0xff]
        %v221 = vld [vmem:[%s217 + $0x18] sm:$0xff]
        %v222 = vld [vmem:[#allocation7] sm:$0xf]
        %s223 = scalar_lea.vmem [#allocation7], 4
        %v224 = vld [vmem:[%s223] sm:$0xf]
        %v229 = vunpack.c.l.b16 %v218
        %v230 = vunpack.c.h.b16 %v218
        %v231 = vunpack.c.l.b16 %v219
        %v232 = vunpack.c.h.b16 %v219
        %v233 = vunpack.c.l.b16 %v220
        %v234 = vunpack.c.h.b16 %v220
        %v235 = vunpack.c.l.b16 %v221
        %v236 = vunpack.c.h.b16 %v221
        %v237 = vpack.c.b16 %v231, %v229
        %v238 = vpack.c.b16 %v232, %v230
        %v239 = vpack.c.b16 %v235, %v233
        %v240 = vpack.c.b16 %v236, %v234
        %241 = vrot.lane.b32.xlu0 %v237, 120
        %v242 = vpop.permute.xlu0 %241
        %243 = vrot.lane.b32.xlu0 %v238, 120
        %v244 = vpop.permute.xlu0 %243
        %245 = vrot.lane.b32.xlu0 %v239, 120
        %v246 = vpop.permute.xlu0 %245
        %247 = vrot.lane.b32.xlu0 %v240, 120
        %v248 = vpop.permute.xlu0 %247
        %vm249 = vcmask 982016
        %v250 = vsel %vm249, %v242, %v244
        %v251 = vsel %vm249, %v246, %v248
        %vm254 = vcmask 261120
        %v256 = vsel %vm254, %v224, 0
        %258 = vmatprep.subr.bf16.mxu0 0
        %259 = vmatpush1.bf16.msra.mxu0 %v250
        %260 = vmatprep.subr.bf16.mxu0 0
        %261 = vmatpush1.bf16.msra.mxu0 %v251
        %262 = vmatprep.subr.bf16.mxu0 0
        %263 = vmatpush1.bf16.msra.mxu0 0
        %264 = vmatprep.subr.bf16.mxu0 0
        %265 = vmatpush1.bf16.msra.mxu0 0
        %266 = vmatprep.subr.bf16.mxu0 0
        %267 = vmatpush1.bf16.msra.mxu0 0
        %268 = vmatprep.subr.bf16.mxu0 0
        %269 = vmatpush1.bf16.msra.mxu0 0
        %270 = vmatprep.subr.bf16.mxu0 0
        %271 = vmatpush1.bf16.msra.mxu0 0
        %272 = vmatprep.subr.bf16.mxu0 0
        %273 = vmatpush1.bf16.msra.mxu0 0
        %274 = vmatprep.subr.bf16.mxu0 0
        %275 = vmatpush1.bf16.msra.mxu0 0
        %276 = vmatprep.subr.bf16.mxu0 0
        %277 = vmatpush1.bf16.msra.mxu0 0
        %278 = vmatprep.subr.bf16.mxu0 0
        %279 = vmatpush1.bf16.msra.mxu0 0
        %280 = vmatprep.subr.bf16.mxu0 0
        %281 = vmatpush1.bf16.msra.mxu0 0
        %282 = vmatprep.subr.bf16.mxu0 0
        %283 = vmatpush1.bf16.msra.mxu0 0
        %284 = vmatprep.subr.bf16.mxu0 0
        %285 = vmatpush1.bf16.msra.mxu0 0
        %286 = vmatprep.subr.bf16.mxu0 0
        %287 = vmatpush1.bf16.msra.mxu0 0
        %288 = vmatprep.subr.bf16.mxu0 0
        %289 = vmatpush1.bf16.msra.mxu0 0
        %290 = vmatprep.mubr.bf16.mxu0 0
        %291 = vmatmul.mubr.bf16.gmra.mrb[0].mxu0 %v256
        %v292 = vpop.f32.mrb[0].mxu0
        %v293 = vadd.f32 0.0, %v292
        %v294 = vpop.f32.mrb[0].mxu0
        %v295 = vpop.f32.mrb[0].mxu0
        %v296 = vpop.f32.mrb[0].mxu0
        %297 = vdwg.mxu0
        %v301 = vsel %vm254, %v222, 0
        %303 = vmatprep.subr.bf16.mxu0 0
        %304 = vmatpush1.bf16.msra.mxu0 %v237
        %305 = vmatprep.subr.bf16.mxu0 0
        %306 = vmatpush1.bf16.msra.mxu0 %v239
        %307 = vmatprep.subr.bf16.mxu0 0
        %308 = vmatpush1.bf16.msra.mxu0 0
        %309 = vmatprep.subr.bf16.mxu0 0
        %310 = vmatpush1.bf16.msra.mxu0 0
        %311 = vmatprep.subr.bf16.mxu0 0
        %312 = vmatpush1.bf16.msra.mxu0 0
        %313 = vmatprep.subr.bf16.mxu0 0
        %314 = vmatpush1.bf16.msra.mxu0 0
        %315 = vmatprep.subr.bf16.mxu0 0
        %316 = vmatpush1.bf16.msra.mxu0 0
        %317 = vmatprep.subr.bf16.mxu0 0
        %318 = vmatpush1.bf16.msra.mxu0 0
        %319 = vmatprep.subr.bf16.mxu0 0
        %320 = vmatpush1.bf16.msra.mxu0 0
        %321 = vmatprep.subr.bf16.mxu0 0
        %322 = vmatpush1.bf16.msra.mxu0 0
        %323 = vmatprep.subr.bf16.mxu0 0
        %324 = vmatpush1.bf16.msra.mxu0 0
        %325 = vmatprep.subr.bf16.mxu0 0
        %326 = vmatpush1.bf16.msra.mxu0 0
        %327 = vmatprep.subr.bf16.mxu0 0
        %328 = vmatpush1.bf16.msra.mxu0 0
        %329 = vmatprep.subr.bf16.mxu0 0
        %330 = vmatpush1.bf16.msra.mxu0 0
        %331 = vmatprep.subr.bf16.mxu0 0
        %332 = vmatpush1.bf16.msra.mxu0 0
        %333 = vmatprep.subr.bf16.mxu0 0
        %334 = vmatpush1.bf16.msra.mxu0 0
        %335 = vmatprep.mubr.bf16.mxu0 0
        %336 = vmatmul.mubr.bf16.gmra.mrb[0].mxu0 %v301
        %v337 = vpop.f32.mrb[0].mxu0
        %v338 = vadd.f32 %v293, %v337
        %v339 = vpop.f32.mrb[0].mxu0
        %v340 = vpop.f32.mrb[0].mxu0
        %v341 = vpop.f32.mrb[0].mxu0
        %342 = vdwg.mxu0
        %v343 = vlaneseq
        %v344 = vand.u32 %v343, 127
        %v345 = vstv %s213
        %v346 = vadd.s32 %v344, %v345
        %vm347 = vcmp.lt.s32.totalorder %v346, 64
        %v348 = vsel %vm347, 1, 0
        %vm349 = vcmp.eq.s32.totalorder %v348, 1
        %v350 = vsel %vm349, %v338, 0.0
        %v351 = vld [vmem:[#allocation2] sm:$0xff]
        %352 = vadd.xlane.f32.xlu0 %v350
        %v353 = vpop.xlane.xlu0 %352
        %v354 = vadd.f32 %v351, %v353
        %vm355 = vcmask 7168
        %356 = vst.msk [vmem:[#allocation2] sm:$0xff] %vm355, %v354
        %v357 = vld [vmem:[#allocation3] sm:$0xff]
        %v358 = vmul.f32 %v350, %v350
        %359 = vadd.xlane.f32.xlu0 %v358
        %v360 = vpop.xlane.xlu0 %359
        %v361 = vadd.f32 %v357, %v360
        %362 = vst.msk [vmem:[#allocation3] sm:$0xff] %vm355, %v361
        %s363 = scalar_lea.vmem %s204, %s214 [#allocation9]
        %364 = vst [vmem:[%s363] sm:$0xff] %v350
        // Predicated region
        $region41: #{tpu_custom_call.1} parent=27 // pred_check
          %p365 = pneg %p206
        $region42: #{tpu_custom_call.1} parent=27 // pred_check_branch
          %367 = sbr.rel (%p365) target = $region44
        $region43: #{tpu_custom_call.1} parent=27 // pred_region
          %v368 = vld [vmem:[#allocation2] sm:$0xff]
          %v369 = vmul.f32 %v368, 0.015625
          %v370 = vld [vmem:[#allocation3] sm:$0xff]
          %v371 = vmul.f32 %v370, 0.015625
          %v372 = vmul.f32 %v369, %v369
          %v373 = vsub.f32 %v371, %v372
          %v374 = vadd.f32 %v373, 1e-05
          %v375 = vrsqrt.pop %v374
          %v376 = vld [vmem:[%s204] sm:$0xff]
          %378 = vset.pattern.permute.xlu0 0
          %379 = vperm.xlu0 %378, %v369
          %v380 = vpop.permute.xlu0 %379
          %v382 = vsub.f32 %v376, %v380
          %384 = vset.pattern.permute.xlu0 0
          %385 = vperm.xlu0 %384, %v375
          %v386 = vpop.permute.xlu0 %385
          %v388 = vmul.f32 %v382, %v386
          %vm389 = vcmp.ge.f32.partialorder %v388, 0.0
          %v390 = vmul.f32 %v388, 0.2
          %v391 = vsel %vm389, %v388, %v390
          %392 = vst [vmem:[%s204] sm:$0xff] %v391
        $region44: #{tpu_custom_call.1} parent=27 // pred_fallthru
          _
        %s393 = sand.u32 %s101, 1
        %s394 = scalar_lea.sflag [#allocation6], %s393
        %s395 = sand.u32 %s101, 1
        %s396 = smul.addr %s395, 8
        %s397 = scalar_lea.vmem [#allocation9], %s396
        // Predicated region
        $region45: #{tpu_custom_call.1} parent=27 // pred_check
          %p398 = pneg %p111
        $region46: #{tpu_custom_call.1} parent=27 // pred_check_branch
          %400 = sbr.rel (%p398) target = $region48
        $region47: #{tpu_custom_call.1} parent=27 // pred_region
          %s402 = ssub.s32 128, 128
          %403 = vsyncadd %s394, %s402
          %s404 = sadd.s32 %s26, %s25
          %s405 = smul.addr %s404, 128
          %s406 = scalar_lea.hbm %s2, %s405
          %s408 = sshll.u32 %s397, 4
          %s409 = int_to_ptr.vmem [resolvable:$true] %s408
          %411 = dma.vmem_to_hbm [thread:$0]  %s409, 128, %s406, %s394
        $region48: #{tpu_custom_call.1} parent=27 // pred_fallthru
          _
      $region28: #{tpu_custom_call.1} parent=5 // pred_fallthru
        _
      %p412 = scmp.le.s32.totalorder 2, %s15
      // Predicated region
      $region49: #{tpu_custom_call.1} parent=5 // pred_check
        %p413 = pneg %p412
      $region50: #{tpu_custom_call.1} parent=5 // pred_check_branch
        %415 = sbr.rel (%p413) target = $region52
      $region51: #{tpu_custom_call.1} parent=5 // pred_region
        %s416 = ssub.s32 %s15, 2
        // Predicated region
        $region53: #{tpu_custom_call.1} parent=51 // pred_check
          %p417 = pneg %p117
        $region54: #{tpu_custom_call.1} parent=51 // pred_check_branch
          %419 = sbr.rel (%p417) target = $region56
        $region55: #{tpu_custom_call.1} parent=51 // pred_region
          %s420 = sand.u32 %s102, 1
          %s421 = scalar_lea.sflag [#allocation6], %s420
          %s422 = sand.u32 %s102, 1
          %s423 = smul.addr %s422, 8
          %s424 = scalar_lea.vmem [#allocation9], %s423
          %425 = dma.done %s421, 128
        $region56: #{tpu_custom_call.1} parent=51 // pred_fallthru
          _
      $region52: #{tpu_custom_call.1} parent=5 // pred_fallthru
        _
    $region6: #{tpu_custom_call.1} parent=1 // loop_footer
      %s19 = sadd.s32 1, %s15
    $region7: #{tpu_custom_call.1} parent=1 // loop_footer_branch
      %14 = sbr.rel target = $region3
    $region8: #{tpu_custom_call.1} parent=1 // loop_exit
      _
    %426 = vsyncpa [#allocation5], 1
    %s427 = scalar_lea.sflag [#allocation5], 1
    %428 = vsyncpa %s427, 1
    %429 = vsyncpa [#allocation8], 1
    %430 = vsyncpa [#allocation6], 1
    %s431 = scalar_lea.sflag [#allocation6], 1
    %432 = vsyncpa %s431, 1

// kernel: tpu_custom_call.1
$region0: #{tpu_custom_call.1}
  #allocation0 [shape = 'u32[]', space=smem, size = 0x4, offset = 0x4, fixed_abs, tag = 'smem constant byte address 0x4 - core index']
  #allocation1 [shape = 'u32[144,128]{1,0:T(1,128)}', space=vmem, size = 0x12000, scoped, tag = 'internal scratch']
  #allocation2 [shape = 'f32[8,1]{1,0:T(8,128)}', space=vmem, size = 0x1000, scoped, tag = 'scratch operand']
  #allocation3 [shape = 'f32[8,1]{1,0:T(8,128)}', space=vmem, size = 0x1000, scoped, tag = 'scratch operand']
  %s0 = inlined_call_operand.hbm [shape: bf16[2,32,256], index: 0, kind: input, shape index: {}]
  %s1 = inlined_call_operand.hbm [shape: bf16[2,8,32], index: 1, kind: input, shape index: {}]
  %s2 = inlined_call_operand.hbm [shape: f32[2,8,128], index: 2, kind: output, shape index: {}]
  %s3 = sld [smem:[#allocation0]]
  $region57: #{tpu_custom_call.1} parent=0
    _
  %s5 = ssub.s32 1, %s3
  %s6 = scalar_select 0, %s5, %s3
  $region1: #{tpu_custom_call.1} parent=0
    #allocation4 [shape = 'u8[32768]{0}', space=vmem, size = 0x8000, scoped, tag = 'input window, operand 0']
    #allocation5 [shape = 's32[2]{0}', space=sflag, size = 0x8, scoped, tag = 'scoped memory for tpu_custom_call.1']
    #allocation6 [shape = 's32[2]{0}', space=sflag, size = 0x8, scoped, tag = 'scoped memory for tpu_custom_call.1']
    #allocation7 [shape = 'u8[4096]{0}', space=vmem, size = 0x1000, scoped, tag = 'input window, operand 1, single buffered']
    #allocation8 [shape = 's32[1]{0}', space=sflag, size = 0x4, scoped, tag = 'scoped memory for tpu_custom_call.1']
    #allocation9 [shape = 'u8[8192]{0}', space=vmem, size = 0x2000, scoped, tag = 'output window, operand 0']
    %7 = vsyncpa [#allocation5], 0
    %s8 = scalar_lea.sflag [#allocation5], 1
    %9 = vsyncpa %s8, 0
    %10 = vsyncpa [#allocation8], 0
    %11 = vsyncpa [#allocation6], 0
    %s12 = scalar_lea.sflag [#allocation6], 1
    %13 = vsyncpa %s12, 0
    loop: start=0, step=1, limit=4
    $region2: #{tpu_custom_call.1} parent=1 // loop_pre_header
      _
    $region3: #{tpu_custom_call.1} parent=1 // loop_header
      %s15 = sphi 0, %s19
      %p16 = scmp.ge.s32.totalorder %s15, 4
      %s22 = sphi 0, %s41
      %s23 = sphi 0, %s37
      %s24 = sphi 0, %s33
      %s25 = sphi 0, %s22
      %s26 = sphi 0, %s23
      %s27 = sphi 0, %s24
      %s28 = sphi 0, %s25
      %s29 = sphi 0, %s26
      %s30 = sphi 0, %s27
      %s44 = sphi 0, %s46
      %s47 = sphi 0, %s44
      %s48 = sphi 0, %s47
      %s64 = sphi 0, %s48
      %s70 = sphi 0, %s72
      %s73 = sphi 0, %s70
      %s74 = sphi 0, %s73
      %s90 = sphi 0, %s74
      %s98 = sphi 0, %s100
      %s101 = sphi 0, %s98
      %s102 = sphi 0, %s101
      %s118 = sphi 0, %s102
    $region4: #{tpu_custom_call.1} parent=1 // loop_header_branch
      %18 = sbr.rel (%p16) target = $region8
    $region5: #{tpu_custom_call.1} parent=1 // loop_body
      %s20 = ssub.s32 %s15, 1
      %s21 = ssub.s32 %s15, 2
      %s31 = sadd.s32 1, %s24
      %p32 = scmp.ge.s32.totalorder %s31, 1
      %s33 = scalar_select %p32, 0, %s31
      %s34 = sadd.s32 1, %s23
      %s35 = scalar_select %p32, %s34, %s23
      %p36 = scmp.ge.s32.totalorder %s35, 1
      %s37 = scalar_select %p36, 0, %s35
      %s38 = sadd.s32 1, %s22
      %s39 = scalar_select %p36, %s38, %s22
      %p40 = scmp.ge.s32.totalorder %s39, 2
      %s41 = scalar_select %p40, 0, %s39
      %s42 = ssub.s32 %s22, %s41
      %p43 = scmp.eq.s32.totalorder %s42, 0
      %s45 = sadd.s32 %s44, 1
      %s46 = scalar_select %p43, %s44, %s45
      %p49 = pneg %p43
      %p50 = scmp.eq.s32.totalorder %s15, 1
      %p51 = por %p49, %p50
      %p52 = scmp.ne.s32.totalorder %s44, %s47
      %p53 = scmp.eq.s32.totalorder %s15, 0
      %p54 = por %p52, %p53
      %p55 = scmp.ne.s32.totalorder %s44, %s47
      %p56 = scmp.eq.s32.totalorder %s20, 1
      %p57 = por %p55, %p56
      %p58 = scmp.ne.s32.totalorder %s47, %s48
      %p59 = scmp.eq.s32.totalorder %s20, 0
      %p60 = por %p58, %p59
      %p61 = scmp.ne.s32.totalorder %s47, %s48
      %p62 = scmp.eq.s32.totalorder %s21, 1
      %p63 = por %p61, %p62
      %p65 = scmp.ne.s32.totalorder %s48, %s64
      %p66 = scmp.eq.s32.totalorder %s21, 0
      %p67 = por %p65, %p66
      %s68 = ssub.s32 %s23, %s37
      %p69 = scmp.eq.s32.totalorder %s68, 0
      %s71 = sadd.s32 %s70, 1
      %s72 = scalar_select %p69, %s70, %s71
      %p75 = pneg %p69
      %p76 = scmp.eq.s32.totalorder %s15, 1
      %p77 = por %p75, %p76
      %p78 = scmp.ne.s32.totalorder %s70, %s73
      %p79 = scmp.eq.s32.totalorder %s15, 0
      %p80 = por %p78, %p79
      %p81 = scmp.ne.s32.totalorder %s70, %s73
      %p82 = scmp.eq.s32.totalorder %s20, 1
      %p83 = por %p81, %p82
      %p84 = scmp.ne.s32.totalorder %s73, %s74
      %p85 = scmp.eq.s32.totalorder %s20, 0
      %p86 = por %p84, %p85
      %p87 = scmp.ne.s32.totalorder %s73, %s74
      %p88 = scmp.eq.s32.totalorder %s21, 1
      %p89 = por %p87, %p88
      %p91 = scmp.ne.s32.totalorder %s74, %s90
      %p92 = scmp.eq.s32.totalorder %s21, 0
      %p93 = por %p91, %p92
      %s94 = ssub.s32 %s22, %s41
      %s95 = ssub.s32 %s23, %s37
      %s96 = sor.u32 %s94, %s95
      %p97 = scmp.eq.s32.totalorder %s96, 0
      %s99 = sadd.s32 %s98, 1
      %s100 = scalar_select %p97, %s98, %s99
      %p103 = pneg %p97
      %p104 = scmp.eq.s32.totalorder %s15, 1
      %p105 = por %p103, %p104
      %p106 = scmp.ne.s32.totalorder %s98, %s101
      %p107 = scmp.eq.s32.totalorder %s15, 0
      %p108 = por %p106, %p107
      %p109 = scmp.ne.s32.totalorder %s98, %s101
      %p110 = scmp.eq.s32.totalorder %s20, 1
      %p111 = por %p109, %p110
      %p112 = scmp.ne.s32.totalorder %s101, %s102
      %p113 = scmp.eq.s32.totalorder %s20, 0
      %p114 = por %p112, %p113
      %p115 = scmp.ne.s32.totalorder %s101, %s102
      %p116 = scmp.eq.s32.totalorder %s21, 1
      %p117 = por %p115, %p116
      %p119 = scmp.ne.s32.totalorder %s102, %s118
      %p120 = scmp.eq.s32.totalorder %s21, 0
      %p121 = por %p119, %p120
      %p122 = scmp.le.s32.totalorder 1, %s15
      %p123 = scmp.lt.s32.totalorder %s15, 3
      %p124 = pnand %p122, %p123
      %p125 = pneg %p124
      // Predicated region
      $region9: #{tpu_custom_call.1} parent=5 // pred_check
        _
      $region10: #{tpu_custom_call.1} parent=5 // pred_check_branch
        %127 = sbr.rel (%p124) target = $region12
      $region11: #{tpu_custom_call.1} parent=5 // pred_region
        %s128 = ssub.s32 %s15, 1
        // Predicated region
        $region13: #{tpu_custom_call.1} parent=11 // pred_check
          %p129 = pneg %p86
        $region14: #{tpu_custom_call.1} parent=11 // pred_check_branch
          %131 = sbr.rel (%p129) target = $region16
        $region15: #{tpu_custom_call.1} parent=11 // pred_region
          %s133 = ssub.s32 128, 128
          %134 = vsyncadd [#allocation8], %s133
          %s135 = smul.addr %s26, 64
          %s136 = scalar_lea.hbm %s1, %s135
          %s137 = sshll.u32 [#allocation7], 4
          %s138 = int_to_ptr.vmem [resolvable:$true] %s137
          %143 = dma.hbm_to_vmem [thread:$0]  %s136, 128, %s138, [#allocation8], 64, 64, 4
        $region16: #{tpu_custom_call.1} parent=11 // pred_fallthru
          _
      $region12: #{tpu_custom_call.1} parent=5 // pred_fallthru
        _
      %p144 = scmp.lt.s32.totalorder %s15, 2
      // Predicated region
      $region17: #{tpu_custom_call.1} parent=5 // pred_check
        %p145 = pneg %p144
      $region18: #{tpu_custom_call.1} parent=5 // pred_check_branch
        %147 = sbr.rel (%p145) target = $region20
      $region19: #{tpu_custom_call.1} parent=5 // pred_region
        // Predicated region
        $region21: #{tpu_custom_call.1} parent=19 // pred_check
          %p148 = pneg %p54
        $region22: #{tpu_custom_call.1} parent=19 // pred_check_branch
          %150 = sbr.rel (%p148) target = $region24
        $region23: #{tpu_custom_call.1} parent=19 // pred_region
          %s151 = sand.u32 %s44, 1
          %s152 = scalar_lea.sflag [#allocation5], %s151
          %s153 = sand.u32 %s44, 1
          %s154 = smul.addr %s153, 32
          %s155 = scalar_lea.vmem [#allocation4], %s154
          %s157 = ssub.s32 512, 512
          %158 = vsyncadd %s152, %s157
          %s159 = smul.addr %s22, 8
          %s160 = smul.addr %s159, 64
          %s161 = scalar_lea.hbm %s0, %s160
          %s162 = sshll.u32 %s155, 4
          %s163 = int_to_ptr.vmem [resolvable:$true] %s162
          %168 = dma.hbm_to_vmem [thread:$0]  %s161, 512, %s163, %s152, 128, 128, 8
        $region24: #{tpu_custom_call.1} parent=19 // pred_fallthru
          _
      $region20: #{tpu_custom_call.1} parent=5 // pred_fallthru
        _
      %p169 = scmp.le.s32.totalorder 1, %s15
      %p170 = scmp.lt.s32.totalorder %s15, 3
      %p171 = pnand %p169, %p170
      %p172 = pneg %p171
      // Predicated region
      $region25: #{tpu_custom_call.1} parent=5 // pred_check
        _
      $region26: #{tpu_custom_call.1} parent=5 // pred_check_branch
        %174 = sbr.rel (%p171) target = $region28
      $region27: #{tpu_custom_call.1} parent=5 // pred_region
        %s175 = ssub.s32 %s15, 1
        %s176 = sand.u32 %s47, 1
        %s177 = scalar_lea.sflag [#allocation5], %s176
        %s178 = sand.u32 %s47, 1
        %s179 = smul.addr %s178, 32
        %s180 = scalar_lea.vmem [#allocation4], %s179
        // Predicated region
        $region29: #{tpu_custom_call.1} parent=27 // pred_check
          %p181 = pneg %p60
        $region30: #{tpu_custom_call.1} parent=27 // pred_check_branch
          %183 = sbr.rel (%p181) target = $region32
        $region31: #{tpu_custom_call.1} parent=27 // pred_region
          %184 = dma.done %s177, 512
        $region32: #{tpu_custom_call.1} parent=27 // pred_fallthru
          _
        // Predicated region
        $region33: #{tpu_custom_call.1} parent=27 // pred_check
          %p185 = pneg %p86
        $region34: #{tpu_custom_call.1} parent=27 // pred_check_branch
          %187 = sbr.rel (%p185) target = $region36
        $region35: #{tpu_custom_call.1} parent=27 // pred_region
          %188 = dma.done [#allocation8], 128
        $region36: #{tpu_custom_call.1} parent=27 // pred_fallthru
          _
        %s189 = sand.u32 %s47, 1
        %s190 = scalar_lea.sflag [#allocation5], %s189
        %s191 = sand.u32 %s47, 1
        %s192 = smul.addr %s191, 32
        %s193 = scalar_lea.vmem [#allocation4], %s192
        %p194 = pneg %p60
        %p195 = pneg %p57
        %p196 = pneg %p86
        %p197 = pneg %p83
        %p198 = pneg %p114
        %p199 = pneg %p111
        %s200 = sand.u32 %s101, 1
        %s201 = scalar_lea.sflag [#allocation6], %s200
        %s202 = sand.u32 %s101, 1
        %s203 = smul.addr %s202, 8
        %s204 = scalar_lea.vmem [#allocation9], %s203
        %p206 = scmp.eq.s32.totalorder %s27, 0
        // Predicated region
        $region37: #{tpu_custom_call.1} parent=27 // pred_check
          %p207 = pneg %p206
        $region38: #{tpu_custom_call.1} parent=27 // pred_check_branch
          %209 = sbr.rel (%p207) target = $region40
        $region39: #{tpu_custom_call.1} parent=27 // pred_region
          %vm210 = vcmask 7168
          %211 = vst.msk [vmem:[#allocation2] sm:$0xff] %vm210, 0.0
          %212 = vst.msk [vmem:[#allocation3] sm:$0xff] %vm210, 0.0
        $region40: #{tpu_custom_call.1} parent=27 // pred_fallthru
          _
        %s213 = smul.u32 %s27, 128
        %s214 = sshra.s32 %s213, 7
        %s215 = sand.u32 %s213, 127
        %s216 = smul.addr %s214, 4
        %s217 = scalar_lea.vmem %s180, %s216 [#allocation4]
        %v218 = vld [vmem:[%s217] sm:$0xff]
        %v219 = vld [vmem:[%s217 + $0x8] sm:$0xff]
        %v220 = vld [vmem:[%s217 + $0x10] sm:$0xff]
        %v221 = vld [vmem:[%s217 + $0x18] sm:$0xff]
        %v222 = vld [vmem:[#allocation7] sm:$0xf]
        %s223 = scalar_lea.vmem [#allocation7], 4
        %v224 = vld [vmem:[%s223] sm:$0xf]
        %v229 = vunpack.c.l.b16 %v218
        %v230 = vunpack.c.h.b16 %v218
        %v231 = vunpack.c.l.b16 %v219
        %v232 = vunpack.c.h.b16 %v219
        %v233 = vunpack.c.l.b16 %v220
        %v234 = vunpack.c.h.b16 %v220
        %v235 = vunpack.c.l.b16 %v221
        %v236 = vunpack.c.h.b16 %v221
        %v237 = vpack.c.b16 %v231, %v229
        %v238 = vpack.c.b16 %v232, %v230
        %v239 = vpack.c.b16 %v235, %v233
        %v240 = vpack.c.b16 %v236, %v234
        %241 = vrot.lane.b32.xlu0 %v237, 120
        %v242 = vpop.permute.xlu0 %241
        %243 = vrot.lane.b32.xlu0 %v238, 120
        %v244 = vpop.permute.xlu0 %243
        %245 = vrot.lane.b32.xlu0 %v239, 120
        %v246 = vpop.permute.xlu0 %245
        %247 = vrot.lane.b32.xlu0 %v240, 120
        %v248 = vpop.permute.xlu0 %247
        %vm249 = vcmask 982016
        %v250 = vsel %vm249, %v242, %v244
        %v251 = vsel %vm249, %v246, %v248
        %vm254 = vcmask 261120
        %v256 = vsel %vm254, %v224, 0
        %258 = vmatprep.subr.bf16.mxu0 0
        %259 = vmatpush1.bf16.msra.mxu0 %v250
        %260 = vmatprep.subr.bf16.mxu0 0
        %261 = vmatpush1.bf16.msra.mxu0 %v251
        %262 = vmatprep.subr.bf16.mxu0 0
        %263 = vmatpush1.bf16.msra.mxu0 0
        %264 = vmatprep.subr.bf16.mxu0 0
        %265 = vmatpush1.bf16.msra.mxu0 0
        %266 = vmatprep.subr.bf16.mxu0 0
        %267 = vmatpush1.bf16.msra.mxu0 0
        %268 = vmatprep.subr.bf16.mxu0 0
        %269 = vmatpush1.bf16.msra.mxu0 0
        %270 = vmatprep.subr.bf16.mxu0 0
        %271 = vmatpush1.bf16.msra.mxu0 0
        %272 = vmatprep.subr.bf16.mxu0 0
        %273 = vmatpush1.bf16.msra.mxu0 0
        %274 = vmatprep.subr.bf16.mxu0 0
        %275 = vmatpush1.bf16.msra.mxu0 0
        %276 = vmatprep.subr.bf16.mxu0 0
        %277 = vmatpush1.bf16.msra.mxu0 0
        %278 = vmatprep.subr.bf16.mxu0 0
        %279 = vmatpush1.bf16.msra.mxu0 0
        %280 = vmatprep.subr.bf16.mxu0 0
        %281 = vmatpush1.bf16.msra.mxu0 0
        %282 = vmatprep.subr.bf16.mxu0 0
        %283 = vmatpush1.bf16.msra.mxu0 0
        %284 = vmatprep.subr.bf16.mxu0 0
        %285 = vmatpush1.bf16.msra.mxu0 0
        %286 = vmatprep.subr.bf16.mxu0 0
        %287 = vmatpush1.bf16.msra.mxu0 0
        %288 = vmatprep.subr.bf16.mxu0 0
        %289 = vmatpush1.bf16.msra.mxu0 0
        %290 = vmatprep.mubr.bf16.mxu0 0
        %291 = vmatmul.mubr.bf16.gmra.mrb[0].mxu0 %v256
        %v292 = vpop.f32.mrb[0].mxu0
        %v293 = vadd.f32 0.0, %v292
        %v294 = vpop.f32.mrb[0].mxu0
        %v295 = vpop.f32.mrb[0].mxu0
        %v296 = vpop.f32.mrb[0].mxu0
        %297 = vdwg.mxu0
        %v301 = vsel %vm254, %v222, 0
        %303 = vmatprep.subr.bf16.mxu0 0
        %304 = vmatpush1.bf16.msra.mxu0 %v237
        %305 = vmatprep.subr.bf16.mxu0 0
        %306 = vmatpush1.bf16.msra.mxu0 %v239
        %307 = vmatprep.subr.bf16.mxu0 0
        %308 = vmatpush1.bf16.msra.mxu0 0
        %309 = vmatprep.subr.bf16.mxu0 0
        %310 = vmatpush1.bf16.msra.mxu0 0
        %311 = vmatprep.subr.bf16.mxu0 0
        %312 = vmatpush1.bf16.msra.mxu0 0
        %313 = vmatprep.subr.bf16.mxu0 0
        %314 = vmatpush1.bf16.msra.mxu0 0
        %315 = vmatprep.subr.bf16.mxu0 0
        %316 = vmatpush1.bf16.msra.mxu0 0
        %317 = vmatprep.subr.bf16.mxu0 0
        %318 = vmatpush1.bf16.msra.mxu0 0
        %319 = vmatprep.subr.bf16.mxu0 0
        %320 = vmatpush1.bf16.msra.mxu0 0
        %321 = vmatprep.subr.bf16.mxu0 0
        %322 = vmatpush1.bf16.msra.mxu0 0
        %323 = vmatprep.subr.bf16.mxu0 0
        %324 = vmatpush1.bf16.msra.mxu0 0
        %325 = vmatprep.subr.bf16.mxu0 0
        %326 = vmatpush1.bf16.msra.mxu0 0
        %327 = vmatprep.subr.bf16.mxu0 0
        %328 = vmatpush1.bf16.msra.mxu0 0
        %329 = vmatprep.subr.bf16.mxu0 0
        %330 = vmatpush1.bf16.msra.mxu0 0
        %331 = vmatprep.subr.bf16.mxu0 0
        %332 = vmatpush1.bf16.msra.mxu0 0
        %333 = vmatprep.subr.bf16.mxu0 0
        %334 = vmatpush1.bf16.msra.mxu0 0
        %335 = vmatprep.mubr.bf16.mxu0 0
        %336 = vmatmul.mubr.bf16.gmra.mrb[0].mxu0 %v301
        %v337 = vpop.f32.mrb[0].mxu0
        %v338 = vadd.f32 %v293, %v337
        %v339 = vpop.f32.mrb[0].mxu0
        %v340 = vpop.f32.mrb[0].mxu0
        %v341 = vpop.f32.mrb[0].mxu0
        %342 = vdwg.mxu0
        %v343 = vlaneseq
        %v344 = vand.u32 %v343, 127
        %v345 = vstv %s213
        %v346 = vadd.s32 %v344, %v345
        %vm347 = vcmp.lt.s32.totalorder %v346, 64
        %v348 = vsel %vm347, 1, 0
        %vm349 = vcmp.eq.s32.totalorder %v348, 1
        %v350 = vsel %vm349, %v338, 0.0
        %v351 = vld [vmem:[#allocation2] sm:$0xff]
        %352 = vadd.xlane.f32.xlu0 %v350
        %v353 = vpop.xlane.xlu0 %352
        %v354 = vadd.f32 %v351, %v353
        %vm355 = vcmask 7168
        %356 = vst.msk [vmem:[#allocation2] sm:$0xff] %vm355, %v354
        %v357 = vld [vmem:[#allocation3] sm:$0xff]
        %v358 = vmul.f32 %v350, %v350
        %359 = vadd.xlane.f32.xlu0 %v358
        %v360 = vpop.xlane.xlu0 %359
        %v361 = vadd.f32 %v357, %v360
        %362 = vst.msk [vmem:[#allocation3] sm:$0xff] %vm355, %v361
        %s363 = scalar_lea.vmem %s204, %s214 [#allocation9]
        %364 = vst [vmem:[%s363] sm:$0xff] %v350
        // Predicated region
        $region41: #{tpu_custom_call.1} parent=27 // pred_check
          %p365 = pneg %p206
        $region42: #{tpu_custom_call.1} parent=27 // pred_check_branch
          %367 = sbr.rel (%p365) target = $region44
        $region43: #{tpu_custom_call.1} parent=27 // pred_region
          %v368 = vld [vmem:[#allocation2] sm:$0xff]
          %v369 = vmul.f32 %v368, 0.015625
          %v370 = vld [vmem:[#allocation3] sm:$0xff]
          %v371 = vmul.f32 %v370, 0.015625
          %v372 = vmul.f32 %v369, %v369
          %v373 = vsub.f32 %v371, %v372
          %v374 = vadd.f32 %v373, 1e-05
          %v375 = vrsqrt.pop %v374
          %v376 = vld [vmem:[%s204] sm:$0xff]
          %378 = vset.pattern.permute.xlu0 0
          %379 = vperm.xlu0 %378, %v369
          %v380 = vpop.permute.xlu0 %379
          %v382 = vsub.f32 %v376, %v380
          %384 = vset.pattern.permute.xlu0 0
          %385 = vperm.xlu0 %384, %v375
          %v386 = vpop.permute.xlu0 %385
          %v388 = vmul.f32 %v382, %v386
          %vm389 = vcmp.ge.f32.partialorder %v388, 0.0
          %v390 = vmul.f32 %v388, 0.2
          %v391 = vsel %vm389, %v388, %v390
          %392 = vst [vmem:[%s204] sm:$0xff] %v391
        $region44: #{tpu_custom_call.1} parent=27 // pred_fallthru
          _
        %s393 = sand.u32 %s101, 1
        %s394 = scalar_lea.sflag [#allocation6], %s393
        %s395 = sand.u32 %s101, 1
        %s396 = smul.addr %s395, 8
        %s397 = scalar_lea.vmem [#allocation9], %s396
        // Predicated region
        $region45: #{tpu_custom_call.1} parent=27 // pred_check
          %p398 = pneg %p111
        $region46: #{tpu_custom_call.1} parent=27 // pred_check_branch
          %400 = sbr.rel (%p398) target = $region48
        $region47: #{tpu_custom_call.1} parent=27 // pred_region
          %s402 = ssub.s32 128, 128
          %403 = vsyncadd %s394, %s402
          %s404 = sadd.s32 %s26, %s25
          %s405 = smul.addr %s404, 128
          %s406 = scalar_lea.hbm %s2, %s405
          %s408 = sshll.u32 %s397, 4
          %s409 = int_to_ptr.vmem [resolvable:$true] %s408
          %411 = dma.vmem_to_hbm [thread:$0]  %s409, 128, %s406, %s394
        $region48: #{tpu_custom_call.1} parent=27 // pred_fallthru
          _
      $region28: #{tpu_custom_call.1} parent=5 // pred_fallthru
        _
      %p412 = scmp.le.s32.totalorder 2, %s15
      // Predicated region
      $region49: #{tpu_custom_call.1} parent=5 // pred_check
        %p413 = pneg %p412
      $region50: #{tpu_custom_call.1} parent=5 // pred_check_branch
        %415 = sbr.rel (%p413) target = $region52
      $region51: #{tpu_custom_call.1} parent=5 // pred_region
        %s416 = ssub.s32 %s15, 2
        // Predicated region
        $region53: #{tpu_custom_call.1} parent=51 // pred_check
          %p417 = pneg %p117
        $region54: #{tpu_custom_call.1} parent=51 // pred_check_branch
          %419 = sbr.rel (%p417) target = $region56
        $region55: #{tpu_custom_call.1} parent=51 // pred_region
          %s420 = sand.u32 %s102, 1
          %s421 = scalar_lea.sflag [#allocation6], %s420
          %s422 = sand.u32 %s102, 1
          %s423 = smul.addr %s422, 8
          %s424 = scalar_lea.vmem [#allocation9], %s423
          %425 = dma.done %s421, 128
        $region56: #{tpu_custom_call.1} parent=51 // pred_fallthru
          _
      $region52: #{tpu_custom_call.1} parent=5 // pred_fallthru
        _
    $region6: #{tpu_custom_call.1} parent=1 // loop_footer
      %s19 = sadd.s32 1, %s15
    $region7: #{tpu_custom_call.1} parent=1 // loop_footer_branch
      %14 = sbr.rel target = $region3
    $region8: #{tpu_custom_call.1} parent=1 // loop_exit
      _
    %426 = vsyncpa [#allocation5], 1
    %s427 = scalar_lea.sflag [#allocation5], 1
    %428 = vsyncpa %s427, 1
    %429 = vsyncpa [#allocation8], 1
    %430 = vsyncpa [#allocation6], 1
    %s431 = scalar_lea.sflag [#allocation6], 1
    %432 = vsyncpa %s431, 1

</llo_original>
